<compile_context>
chip_gen: v6e
topology: v6e:2x2x1
jax: 0.10.0
libtpu: 0.0.40
codegen_flags: <defaults>
</compile_context>

<pallas_src>
import jax
import jax.numpy as jnp
from jax.experimental import pallas as pl
from jax.experimental.pallas import tpu as pltpu


# ----------------------------- kernel -----------------------------------


def _affine_kernel(x_ref, scale_ref, bias_ref, o_ref):
    # x_ref: (TS, H); scale_ref / bias_ref: (1, H) broadcast over rows.
    o_ref[...] = x_ref[...] * scale_ref[...] + bias_ref[...]


# ----------------------------- wrapper -----------------------------------


def _affine_call(x, scale, bias, *, target_block_bytes=4 * 1024 * 1024):
    """out = x * scale + bias, with scale/bias broadcast over all but the last dim.

    Flattens leading dims to rows and tiles rows so the double-buffered
    (input + output) pipelined footprint stays comfortably inside scoped VMEM
    on every TPU generation (v5e / v6e / v7x), while keeping blocks large
    enough (~4 MiB) to sit near the HBM roofline.
    """
    orig_shape = x.shape
    H = orig_shape[-1]
    x2 = x.reshape(-1, H)
    N = x2.shape[0]

    scale2 = jnp.asarray(scale, dtype=x.dtype).reshape(1, H)
    bias2 = jnp.asarray(bias, dtype=x.dtype).reshape(1, H)

    # Row-tile size: ~target_block_bytes per input block.  With input + output
    # each double-buffered that is ~4x the block size of live VMEM (plus the
    # tiny stats), well under the 32 MiB scoped limit set below.
    bytes_per_row = H * jnp.dtype(x2.dtype).itemsize
    ts = max(1, target_block_bytes // max(1, bytes_per_row))
    if ts >= N:
        ts = N  # full extent along rows — always a legal block shape
    else:
        ts = max(8, (ts // 8) * 8)  # tiled dim must stay sublane-aligned
    grid = (pl.cdiv(N, ts),)

    out2 = pl.pallas_call(
        _affine_kernel,
        out_shape=jax.ShapeDtypeStruct((N, H), x.dtype),
        grid_spec=pltpu.PrefetchScalarGridSpec(
            num_scalar_prefetch=0,
            grid=grid,
            in_specs=[
                pl.BlockSpec((ts, H), lambda i: (i, 0)),
                pl.BlockSpec((1, H), lambda i: (0, 0)),
                pl.BlockSpec((1, H), lambda i: (0, 0)),
            ],
            out_specs=pl.BlockSpec((ts, H), lambda i: (i, 0)),
        ),
        compiler_params=pltpu.CompilerParams(
            dimension_semantics=("parallel",),
            vmem_limit_bytes=32 * 1024 * 1024,  # safe on v5e/v6e/v7x
        ),
    )(x2, scale2, bias2)
    return out2.reshape(orig_shape)


# ----------------------------- module ------------------------------------


class EncNormalizer:
    """JAX/Pallas port of the PyTorch EncNormalizer.

    Instead of torch.load(enc_mean_path) / torch.load(enc_std_path) the
    statistics are passed in directly (deterministically generated in
    __main__).
    """

    def __init__(self, enc_mean: jnp.ndarray, enc_std: jnp.ndarray):
        mean = jnp.asarray(enc_mean).reshape(-1)
        std = jnp.asarray(enc_std).reshape(-1)

        # Keep the PyTorch-buffer-shaped (1, 1, H) copies for parity/introspection.
        self.enc_mean = mean[None, None, :]
        self.enc_std = std[None, None, :]

        # Precompute affine coefficients once so each path is a single FMA:
        #   normalize(x)   = x * (1/std) + (-mean/std)
        #   denormalize(x) = x * std     + mean
        inv_std = 1.0 / std
        self._norm_scale = inv_std
        self._norm_bias = -mean * inv_std
        self._denorm_scale = std
        self._denorm_bias = mean

    def forward(self, x):
        # nn.Identity(): no kernel launch, no HBM traffic.
        return x

    __call__ = forward

    def normalize(self, encoding):
        return _affine_call(encoding, self._norm_scale, self._norm_bias)

    def denormalize(self, pred_x_0):
        return _affine_call(pred_x_0, self._denorm_scale, self._denorm_bias)


# ------------------------------ demo -------------------------------------


if __name__ == "__main__":
    key = jax.random.PRNGKey(0)
    k_mean, k_std, k_x = jax.random.split(key, 3)

    B, S, H = 2, 8, 32  # batch, seq, hidden

    # Deterministic synthetic statistics (stand-in for torch.load'd tensors).
    enc_mean = jax.random.normal(k_mean, (H,), dtype=jnp.float32)
    enc_std = jnp.abs(jax.random.normal(k_std, (H,), dtype=jnp.float32)) + 0.5

    x = jax.random.normal(k_x, (B, S, H), dtype=jnp.float32)

    norm = EncNormalizer(enc_mean, enc_std)

    y_fwd = jax.block_until_ready(norm(x))                       # identity
    y_norm = jax.block_until_ready(norm.normalize(x))            # (x-mean)/std
    y_denorm = jax.block_until_ready(norm.denormalize(y_norm))   # roundtrip

    # Reference checks in plain JAX.
    mean_b = enc_mean[None, None, :]
    std_b = enc_std[None, None, :]
    assert jnp.allclose(y_fwd, x, atol=0, rtol=0)
    assert jnp.allclose(y_norm, (x - mean_b) / std_b, atol=1e-5, rtol=1e-5)
    assert jnp.allclose(y_denorm, x, atol=1e-4, rtol=1e-4)

    print("KERNEL_OK")
</pallas_src>

<mosaic_0001>
module attributes {stable_mosaic.version = 11 : i64} {
  func.func @_affine_kernel(%arg0: i32, %arg1: memref<16x32xf32, #tpu.memory_space<vmem>>, %arg2: memref<1x32xf32, #tpu.memory_space<vmem>>, %arg3: memref<1x32xf32, #tpu.memory_space<vmem>>, %arg4: memref<16x32xf32, #tpu.memory_space<vmem>>) attributes {dimension_semantics = [#tpu.dimension_semantics<parallel>], iteration_bounds = array<i64: 1>, scalar_prefetch = 0 : i64, scratch_operands = 0 : i64, tpu.core_type = #tpu.core_type<tc>, window_params = [{transform_indices = @transform_0, window_bounds = array<i64: 16, 32>}, {pipeline_mode = #tpu.pipeline_mode<synchronous>, transform_indices = @transform_1, window_bounds = array<i64: 1, 32>}, {pipeline_mode = #tpu.pipeline_mode<synchronous>, transform_indices = @transform_2, window_bounds = array<i64: 1, 32>}, {transform_indices = @transform_3, window_bounds = array<i64: 16, 32>}]} {
    %c0 = arith.constant 0 : index
    %c0_0 = arith.constant 0 : index
    %0 = vector.load %arg1[%c0, %c0_0] : memref<16x32xf32, #tpu.memory_space<vmem>>, vector<16x32xf32>
    %c0_1 = arith.constant 0 : index
    %c0_2 = arith.constant 0 : index
    %1 = vector.load %arg2[%c0_1, %c0_2] : memref<1x32xf32, #tpu.memory_space<vmem>>, vector<1x32xf32>
    %2 = vector.broadcast %1 : vector<1x32xf32> to vector<16x32xf32>
    %3 = arith.mulf %0, %2 : vector<16x32xf32>
    %c0_3 = arith.constant 0 : index
    %c0_4 = arith.constant 0 : index
    %4 = vector.load %arg3[%c0_3, %c0_4] : memref<1x32xf32, #tpu.memory_space<vmem>>, vector<1x32xf32>
    %5 = vector.broadcast %4 : vector<1x32xf32> to vector<16x32xf32>
    %6 = arith.addf %3, %5 : vector<16x32xf32>
    %c0_5 = arith.constant 0 : index
    %c0_6 = arith.constant 0 : index
    %7 = vector.load %arg4[%c0_5, %c0_6] : memref<16x32xf32, #tpu.memory_space<vmem>>, vector<16x32xf32>
    tpu.vector_store %arg4[%c0_5, %c0_6], %6 {strides = array<i32>} : memref<16x32xf32, #tpu.memory_space<vmem>>, vector<16x32xf32>,
    return
  }
  func.func @transform_0(%arg0: i32) -> (i32, i32) {
    %c0_i32 = arith.constant 0 : i32
    %c0_i32_0 = arith.constant 0 : i32
    return %arg0, %c0_i32 : i32, i32
  }
  func.func @transform_1(%arg0: i32) -> (i32, i32) {
    %c0_i32 = arith.constant 0 : i32
    %c0_i32_0 = arith.constant 0 : i32
    %c0_i32_1 = arith.constant 0 : i32
    return %c0_i32, %c0_i32_0 : i32, i32
  }
  func.func @transform_2(%arg0: i32) -> (i32, i32) {
    %c0_i32 = arith.constant 0 : i32
    %c0_i32_0 = arith.constant 0 : i32
    %c0_i32_1 = arith.constant 0 : i32
    return %c0_i32, %c0_i32_0 : i32, i32
  }
  func.func @transform_3(%arg0: i32) -> (i32, i32) {
    %c0_i32 = arith.constant 0 : i32
    %c0_i32_0 = arith.constant 0 : i32
    return %arg0, %c0_i32 : i32, i32
  }
}

</mosaic_0001>

<llo_original>
// kernel: tpu_custom_call.1
$region0: #{tpu_custom_call.1}
  #allocation0 [shape = 'u32[]', space=smem, size = 0x4, offset = 0x4, fixed_abs, tag = 'smem constant byte address 0x4 - core index']
  #allocation1 [shape = 'u32[144,128]{1,0:T(1,128)}', space=vmem, size = 0x12000, scoped, tag = 'internal scratch']
  %s0 = inlined_call_operand.hbm [shape: f32[16,32], index: 0, kind: input, shape index: {}]
  %s1 = inlined_call_operand.vmem [shape: f32[1,32], index: 1, kind: input, shape index: {}]
  %s2 = inlined_call_operand.vmem [shape: f32[1,32], index: 2, kind: input, shape index: {}]
  %s3 = inlined_call_operand.hbm [shape: f32[16,32], index: 3, kind: output, shape index: {}]
  %s4 = sld [smem:[#allocation0]]
  $region26: #{tpu_custom_call.1} parent=0
    _
  %s6 = ssub.s32 1, %s4
  %s7 = scalar_select 0, %s6, %s4
  $region1: #{tpu_custom_call.1} parent=0
    #allocation2 [shape = 'u8[8192]{0}', space=vmem, size = 0x2000, scoped, tag = 'input window, operand 0, single buffered']
    #allocation3 [shape = 's32[1]{0}', space=sflag, size = 0x4, scoped, tag = 'scoped memory for tpu_custom_call.1']
    #allocation4 [shape = 's32[1]{0}', space=sflag, size = 0x4, scoped, tag = 'scoped memory for tpu_custom_call.1']
    #allocation5 [shape = 'u8[8192]{0}', space=vmem, size = 0x2000, scoped, tag = 'output window, operand 0, single buffered']
    %8 = vsyncpa [#allocation3], 0
    %9 = vsyncpa [#allocation4], 0
    // Predicated region
    $region2: #{tpu_custom_call.1} parent=1 // pred_check
      _
    $region3: #{tpu_custom_call.1} parent=1 // pred_check_branch
      %11 = sbr.rel (0) target = $region5
    $region4: #{tpu_custom_call.1} parent=1 // pred_region
      %s13 = ssub.s32 256, 256
      %14 = vsyncadd [#allocation3], %s13
      %s15 = sshll.u32 [#allocation2], 4
      %s16 = int_to_ptr.vmem [resolvable:$true] %s15
      %21 = dma.hbm_to_vmem [thread:$0]  %s0, 256, %s16, [#allocation3], 128, 128, 8
    $region5: #{tpu_custom_call.1} parent=1 // pred_fallthru
      _
    // Predicated region
    $region6: #{tpu_custom_call.1} parent=1 // pred_check
      _
    $region7: #{tpu_custom_call.1} parent=1 // pred_check_branch
      %23 = sbr.rel (0) target = $region9
    $region8: #{tpu_custom_call.1} parent=1 // pred_region
      _
    $region9: #{tpu_custom_call.1} parent=1 // pred_fallthru
      _
    // Predicated region
    $region10: #{tpu_custom_call.1} parent=1 // pred_check
      _
    $region11: #{tpu_custom_call.1} parent=1 // pred_check_branch
      %25 = sbr.rel (0) target = $region13
    $region12: #{tpu_custom_call.1} parent=1 // pred_region
      _
    $region13: #{tpu_custom_call.1} parent=1 // pred_fallthru
      _
    // Predicated region
    $region14: #{tpu_custom_call.1} parent=1 // pred_check
      _
    $region15: #{tpu_custom_call.1} parent=1 // pred_check_branch
      %27 = sbr.rel (0) target = $region17
    $region16: #{tpu_custom_call.1} parent=1 // pred_region
      %28 = dma.done [#allocation3], 256
    $region17: #{tpu_custom_call.1} parent=1 // pred_fallthru
      _
    %v29 = vld [vmem:[#allocation2] sm:$0xff]
    %v30 = vld [vmem:[#allocation2 + $0x8] sm:$0xff]
    %v31 = vld [vmem:[%s1] sm:$0x1]
    %v33 = vlaneseq
    %v34 = vshrl.u32 %v33, 7
    %v35 = vsub.s32 0, %v34
    %v36 = vrot.slane %v31, %v35
    %v38 = vmul.f32 %v29, %v36
    %v39 = vmul.f32 %v30, %v36
    %v40 = vld [vmem:[%s2] sm:$0x1]
    %v42 = vlaneseq
    %v43 = vshrl.u32 %v42, 7
    %v44 = vsub.s32 0, %v43
    %v45 = vrot.slane %v40, %v44
    %v47 = vadd.f32 %v38, %v45
    %v48 = vadd.f32 %v39, %v45
    %vm49 = vcmask 261120
    %50 = vst.msk [vmem:[#allocation5] sm:$0xff] %vm49, %v47
    %51 = vst.msk [vmem:[#allocation5 + $0x8] sm:$0xff] %vm49, %v48
    // Predicated region
    $region18: #{tpu_custom_call.1} parent=1 // pred_check
      _
    $region19: #{tpu_custom_call.1} parent=1 // pred_check_branch
      %53 = sbr.rel (0) target = $region21
    $region20: #{tpu_custom_call.1} parent=1 // pred_region
      %s55 = ssub.s32 256, 256
      %56 = vsyncadd [#allocation4], %s55
      %s57 = sshll.u32 [#allocation5], 4
      %s58 = int_to_ptr.vmem [resolvable:$true] %s57
      %63 = dma.vmem_to_hbm [thread:$0]  %s58, 256, %s3, [#allocation4], 128, 128, 8
    $region21: #{tpu_custom_call.1} parent=1 // pred_fallthru
      _
    // Predicated region
    $region22: #{tpu_custom_call.1} parent=1 // pred_check
      _
    $region23: #{tpu_custom_call.1} parent=1 // pred_check_branch
      %65 = sbr.rel (0) target = $region25
    $region24: #{tpu_custom_call.1} parent=1 // pred_region
      %66 = dma.done [#allocation4], 256
    $region25: #{tpu_custom_call.1} parent=1 // pred_fallthru
      _
    %67 = vsyncpa [#allocation3], 1
    %68 = vsyncpa [#allocation4], 1

</llo_original>
